<compile_context>
chip_gen: v7x
topology: tpu7x:2x2x1
jax: 0.10.0
libtpu: 0.0.40
codegen_flags: <defaults>
</compile_context>

<pallas_src>
import jax
import jax.numpy as jnp
from jax.experimental import pallas as pl
from jax.experimental.pallas import tpu as pltpu


def _make_mse_partial_kernel(blocks_per_p, n_blocks_total, acc_rows, needs_guard):
    def kernel(x_ref, y_ref, o_ref):
        # o_ref is an (acc_rows, 128) f32 partial-sum block, resident across
        # the reduction (trailing, "arbitrary") grid axis.
        @pl.when(pl.program_id(1) == 0)
        def _init():
            o_ref[...] = jnp.zeros_like(o_ref)

        def _accumulate():
            d = x_ref[...].astype(jnp.float32) - y_ref[...].astype(jnp.float32)
            sq = d * d
            br, ln = sq.shape  # br is a static multiple of acc_rows
            # Fold the row axis into the (acc_rows, 128) accumulator with pure
            # vreg adds (VPU only); acc_rows independent add chains give ILP.
            o_ref[...] += jnp.sum(sq.reshape(br // acc_rows, acc_rows, ln), axis=0)

        if needs_guard:
            blk = pl.program_id(0) * blocks_per_p + pl.program_id(1)
            pl.when(blk < n_blocks_total)(_accumulate)
        else:
            _accumulate()

    return kernel


def mse_loss_seq(x, y, *, block_rows=8192, num_partials=2, acc_rows=32,
                 min_kernel_elems=1 << 20):
    """Mean of (x - y)**2 over all elements (F.mse_loss, reduction='mean')."""
    assert x.shape == y.shape, "mse_loss requires matching shapes"
    n_elem = x.size
    lanes = 128

    xf = jnp.ravel(x)
    yf = jnp.ravel(y)

    rows_total = n_elem // lanes
    # Row tile: multiple of acc_rows (=> also aligned for bf16/int8 packing).
    block_rows = max(acc_rows, (block_rows // acc_rows) * acc_rows)
    eff_rows = min(block_rows, (rows_total // acc_rows) * acc_rows)

    # Small-input bailout: a pallas_call + partial reduce + tail launch is pure
    # overhead for tiny tensors.
    if n_elem == 0 or n_elem < min_kernel_elems or eff_rows < acc_rows:
        d = xf.astype(jnp.float32) - yf.astype(jnp.float32)
        return (jnp.sum(d * d) / jnp.float32(n_elem)).astype(jnp.float32)

    n_blocks_total = rows_total // eff_rows
    num_p = max(1, min(num_partials, n_blocks_total))
    blocks_per_p = (n_blocks_total + num_p - 1) // num_p  # ceil: no dropped blocks
    needs_guard = num_p * blocks_per_p > n_blocks_total

    main_rows = n_blocks_total * eff_rows
    main_elems = main_rows * lanes

    x2 = xf[:main_elems].reshape(main_rows, lanes)
    y2 = yf[:main_elems].reshape(main_rows, lanes)

    itemsize = jnp.dtype(x2.dtype).itemsize
    block_bytes = eff_rows * lanes * itemsize
    # 2 inputs x 2 pipeline buffers x block bytes + headroom for the resident
    # accumulator / misc scratch. Default block_rows=8192 f32 -> ~24 MiB,
    # safe on v7x (64 MiB physical) and above v5e's 16 MiB scoped default.
    vmem_limit = int(min(2 * 2 * block_bytes + (8 << 20), 96 << 20))

    if needs_guard:
        # Clamp the block index on overrun iterations (their accumulation is
        # skipped in-kernel via pl.when), so no tile is ever dropped to an
        # unpipelined jnp pass.
        def in_map(p, i):
            return (jnp.minimum(p * blocks_per_p + i, n_blocks_total - 1), 0)
    else:
        def in_map(p, i):
            return (p * blocks_per_p + i, 0)

    kernel = _make_mse_partial_kernel(blocks_per_p, n_blocks_total, acc_rows,
                                      needs_guard)

    partials = pl.pallas_call(
        kernel,
        out_shape=jax.ShapeDtypeStruct((num_p * acc_rows, lanes), jnp.float32),
        grid_spec=pltpu.PrefetchScalarGridSpec(
            num_scalar_prefetch=0,
            grid=(num_p, blocks_per_p),
            in_specs=[
                pl.BlockSpec((eff_rows, lanes), in_map),
                pl.BlockSpec((eff_rows, lanes), in_map),
            ],
            out_specs=pl.BlockSpec((acc_rows, lanes), lambda p, i: (p, 0)),
        ),
        compiler_params=pltpu.CompilerParams(
            dimension_semantics=("parallel", "arbitrary"),
            vmem_limit_bytes=vmem_limit,
        ),
        cost_estimate=pl.CostEstimate(
            flops=3 * main_elems,
            transcendentals=0,
            bytes_accessed=2 * main_elems * itemsize
            + num_p * acc_rows * lanes * 4,
        ),
    )(x2, y2)

    # Tiny final reduce over (num_p*acc_rows, 128) partials in plain JAX.
    ssum = jnp.sum(partials)

    # Tail: fewer than one tile's worth of elements past the tiled prefix.
    if main_elems < n_elem:
        xt = xf[main_elems:].astype(jnp.float32)
        yt = yf[main_elems:].astype(jnp.float32)
        dt = xt - yt
        ssum = ssum + jnp.sum(dt * dt)

    return (ssum / jnp.float32(n_elem)).astype(jnp.float32)


if __name__ == "__main__":
    # Case 1: small 5-D shape, flat size exactly tile-aligned. Force the kernel
    # path (min_kernel_elems=0) so the Pallas kernel is exercised.
    kx, ky = jax.random.split(jax.random.PRNGKey(0))
    shape1 = (2, 4, 4, 8, 16)  # 4096 elements -> 32 rows of 128
    x1 = jax.random.normal(kx, shape1, dtype=jnp.float32)
    y1 = jax.random.normal(ky, shape1, dtype=jnp.float32)
    out1 = jax.block_until_ready(mse_loss_seq(x1, y1, min_kernel_elems=0))
    ref1 = jnp.mean((x1 - y1) ** 2)
    assert jnp.allclose(out1, ref1, rtol=1e-5, atol=1e-6), (out1, ref1)

    # Case 2: non-aligned 5-D shape -> exercises kernel prefix + jnp tail.
    k2x, k2y = jax.random.split(jax.random.PRNGKey(1))
    shape2 = (3, 4, 5, 8, 9)  # 4320 elements -> 33 rows + 96-elem tail
    x2 = jax.random.normal(k2x, shape2, dtype=jnp.float32)
    y2 = jax.random.normal(k2y, shape2, dtype=jnp.float32)
    out2 = jax.block_until_ready(mse_loss_seq(x2, y2, min_kernel_elems=0))
    ref2 = jnp.mean((x2 - y2) ** 2)
    assert jnp.allclose(out2, ref2, rtol=1e-5, atol=1e-6), (out2, ref2)

    # Case 3: multi-block grid with 2 partials and a non-dividing block count
    # -> exercises the clamped index_map + pl.when skip path.
    k3x, k3y = jax.random.split(jax.random.PRNGKey(2))
    shape3 = (2, 4, 8, 32, 48)  # 98304 elements -> 768 rows -> 3 blocks of 256
    x3 = jax.random.normal(k3x, shape3, dtype=jnp.float32)
    y3 = jax.random.normal(k3y, shape3, dtype=jnp.float32)
    out3 = jax.block_until_ready(
        mse_loss_seq(x3, y3, block_rows=256, num_partials=2, min_kernel_elems=0))
    ref3 = jnp.mean((x3 - y3) ** 2)
    assert jnp.allclose(out3, ref3, rtol=1e-5, atol=1e-6), (out3, ref3)

    # Case 4: default arguments on a small tensor -> exercises the jnp bailout.
    out4 = jax.block_until_ready(mse_loss_seq(x2, y2))
    assert jnp.allclose(out4, ref2, rtol=1e-5, atol=1e-6), (out4, ref2)

    print("KERNEL_OK")
</pallas_src>

<mosaic_0001>
module attributes {stable_mosaic.version = 11 : i64} {
  func.func @kernel(%arg0: i32, %arg1: i32, %arg2: memref<32x128xf32, #tpu.memory_space<vmem>>, %arg3: memref<32x128xf32, #tpu.memory_space<vmem>>, %arg4: memref<32x128xf32, #tpu.memory_space<vmem>>) attributes {dimension_semantics = [#tpu.dimension_semantics<parallel>, #tpu.dimension_semantics<arbitrary>], iteration_bounds = array<i64: 1, 1>, scalar_prefetch = 0 : i64, scratch_operands = 0 : i64, tpu.core_type = #tpu.core_type<tc>, window_params = [{transform_indices = @transform_0, window_bounds = array<i64: 32, 128>}, {transform_indices = @transform_1, window_bounds = array<i64: 32, 128>}, {transform_indices = @transform_2, window_bounds = array<i64: 32, 128>}]} {
    %c0_i32 = arith.constant 0 : i32
    %0 = arith.cmpi eq, %arg1, %c0_i32 : i32
    %1 = arith.extui %0 : i1 to i32
    %c0_i32_0 = arith.constant 0 : i32
    %2 = arith.cmpi ne, %1, %c0_i32_0 : i32
    scf.if %2 {
      %cst_8 = arith.constant 0.000000e+00 : f32
      %12 = vector.broadcast %cst_8 : f32 to vector<32x128xf32>
      %c0_9 = arith.constant 0 : index
      %c0_10 = arith.constant 0 : index
      %13 = vector.load %arg4[%c0_9, %c0_10] : memref<32x128xf32, #tpu.memory_space<vmem>>, vector<32x128xf32>
      tpu.vector_store %arg4[%c0_9, %c0_10], %12 {strides = array<i32>} : memref<32x128xf32, #tpu.memory_space<vmem>>, vector<32x128xf32>,
    } else {
    }
    %c0 = arith.constant 0 : index
    %c0_1 = arith.constant 0 : index
    %3 = vector.load %arg2[%c0, %c0_1] : memref<32x128xf32, #tpu.memory_space<vmem>>, vector<32x128xf32>
    %c0_2 = arith.constant 0 : index
    %c0_3 = arith.constant 0 : index
    %4 = vector.load %arg3[%c0_2, %c0_3] : memref<32x128xf32, #tpu.memory_space<vmem>>, vector<32x128xf32>
    %5 = arith.subf %3, %4 : vector<32x128xf32>
    %6 = arith.mulf %5, %5 : vector<32x128xf32>
    %c0_4 = arith.constant 0 : index
    %c0_5 = arith.constant 0 : index
    %7 = vector.load %arg4[%c0_4, %c0_5] : memref<32x128xf32, #tpu.memory_space<vmem>>, vector<32x128xf32>
    %8 = vector.shape_cast %6 : vector<32x128xf32> to vector<1x32x128xf32>
    %cst = arith.constant dense<0.000000e+00> : vector<32x128xf32>
    %9 = vector.multi_reduction <add>, %8, %cst [0] : vector<1x32x128xf32> to vector<32x128xf32>
    %10 = arith.addf %7, %9 : vector<32x128xf32>
    %c0_6 = arith.constant 0 : index
    %c0_7 = arith.constant 0 : index
    %11 = vector.load %arg4[%c0_6, %c0_7] : memref<32x128xf32, #tpu.memory_space<vmem>>, vector<32x128xf32>
    tpu.vector_store %arg4[%c0_6, %c0_7], %10 {strides = array<i32>} : memref<32x128xf32, #tpu.memory_space<vmem>>, vector<32x128xf32>,
    return
  }
  func.func @transform_0(%arg0: i32, %arg1: i32) -> (i32, i32) {
    %c1_i32 = arith.constant 1 : i32
    %0 = arith.muli %arg0, %c1_i32 : i32
    %1 = arith.addi %0, %arg1 : i32
    %c0_i32 = arith.constant 0 : i32
    %c0_i32_0 = arith.constant 0 : i32
    return %1, %c0_i32 : i32, i32
  }
  func.func @transform_1(%arg0: i32, %arg1: i32) -> (i32, i32) {
    %c1_i32 = arith.constant 1 : i32
    %0 = arith.muli %arg0, %c1_i32 : i32
    %1 = arith.addi %0, %arg1 : i32
    %c0_i32 = arith.constant 0 : i32
    %c0_i32_0 = arith.constant 0 : i32
    return %1, %c0_i32 : i32, i32
  }
  func.func @transform_2(%arg0: i32, %arg1: i32) -> (i32, i32) {
    %c0_i32 = arith.constant 0 : i32
    %c0_i32_0 = arith.constant 0 : i32
    return %arg0, %c0_i32 : i32, i32
  }
}

</mosaic_0001>

<llo_original>
// kernel: tpu_custom_call.1
$region0: #{tpu_custom_call.1}
  #allocation0 [shape = 'u32[]', space=smem, size = 0x4, offset = 0x4, fixed_abs, tag = 'smem constant byte address 0x4 - core index']
  #allocation1 [shape = 'u32[144,128]{1,0:T(1,128)}', space=vmem, size = 0x12000, scoped, tag = 'internal scratch']
  %s0 = inlined_call_operand.hbm [shape: f32[32,128], index: 0, kind: input, shape index: {}]
  %s1 = inlined_call_operand.hbm [shape: f32[32,128], index: 1, kind: input, shape index: {}]
  %s2 = inlined_call_operand.hbm [shape: f32[32,128], index: 2, kind: output, shape index: {}]
  %s3 = sld [smem:[#allocation0]]
  $region30: #{tpu_custom_call.1} parent=0
    _
  %s5 = ssub.s32 1, %s3
  %s6 = scalar_select 0, %s5, %s3
  $region1: #{tpu_custom_call.1} parent=0
    #allocation2 [shape = 'u8[16384]{0}', space=vmem, size = 0x4000, scoped, tag = 'input window, operand 0, single buffered']
    #allocation3 [shape = 's32[1]{0}', space=sflag, size = 0x4, scoped, tag = 'scoped memory for tpu_custom_call.1']
    #allocation4 [shape = 's32[1]{0}', space=sflag, size = 0x4, scoped, tag = 'scoped memory for tpu_custom_call.1']
    #allocation5 [shape = 'u8[16384]{0}', space=vmem, size = 0x4000, scoped, tag = 'input window, operand 1, single buffered']
    #allocation6 [shape = 's32[1]{0}', space=sflag, size = 0x4, scoped, tag = 'scoped memory for tpu_custom_call.1']
    #allocation7 [shape = 'u8[16384]{0}', space=vmem, size = 0x4000, scoped, tag = 'output window, operand 0, single buffered']
    %7 = vsyncpa [#allocation3], 0
    %8 = vsyncpa [#allocation6], 0
    %9 = vsyncpa [#allocation4], 0
    // Predicated region
    $region2: #{tpu_custom_call.1} parent=1 // pred_check
      _
    $region3: #{tpu_custom_call.1} parent=1 // pred_check_branch
      %11 = sbr.rel (0) target = $region5
    $region4: #{tpu_custom_call.1} parent=1 // pred_region
      %s12 = sadd.s32 0, 0
      %s13 = smul.u32 4, %s12
      %s15 = ssub.s32 512, 512
      %16 = vsyncadd [#allocation3], %s15
      %s17 = smul.addr %s13, 128
      %s18 = scalar_lea.hbm %s0, %s17
      %s19 = sshll.u32 [#allocation2], 4
      %s20 = int_to_ptr.vmem [resolvable:$true] %s19
      %25 = dma.hbm_to_vmem [thread:$0]  %s18, 512, %s20, [#allocation3], 128, 128, 8
    $region5: #{tpu_custom_call.1} parent=1 // pred_fallthru
      _
    // Predicated region
    $region6: #{tpu_custom_call.1} parent=1 // pred_check
      _
    $region7: #{tpu_custom_call.1} parent=1 // pred_check_branch
      %27 = sbr.rel (0) target = $region9
    $region8: #{tpu_custom_call.1} parent=1 // pred_region
      %s28 = sadd.s32 0, 0
      %s29 = smul.u32 4, %s28
      %s31 = ssub.s32 512, 512
      %32 = vsyncadd [#allocation6], %s31
      %s33 = smul.addr %s29, 128
      %s34 = scalar_lea.hbm %s1, %s33
      %s35 = sshll.u32 [#allocation5], 4
      %s36 = int_to_ptr.vmem [resolvable:$true] %s35
      %41 = dma.hbm_to_vmem [thread:$0]  %s34, 512, %s36, [#allocation6], 128, 128, 8
    $region9: #{tpu_custom_call.1} parent=1 // pred_fallthru
      _
    // Predicated region
    $region10: #{tpu_custom_call.1} parent=1 // pred_check
      _
    $region11: #{tpu_custom_call.1} parent=1 // pred_check_branch
      %43 = sbr.rel (0) target = $region13
    $region12: #{tpu_custom_call.1} parent=1 // pred_region
      %44 = dma.done [#allocation3], 512
    $region13: #{tpu_custom_call.1} parent=1 // pred_fallthru
      _
    // Predicated region
    $region14: #{tpu_custom_call.1} parent=1 // pred_check
      _
    $region15: #{tpu_custom_call.1} parent=1 // pred_check_branch
      %46 = sbr.rel (0) target = $region17
    $region16: #{tpu_custom_call.1} parent=1 // pred_region
      %47 = dma.done [#allocation6], 512
    $region17: #{tpu_custom_call.1} parent=1 // pred_fallthru
      _
    %s48 = sadd.s32 0, 0
    %s49 = smul.u32 4, %s48
    %s50 = sadd.s32 0, 0
    %s51 = smul.u32 4, %s50
    %p52 = scmp.eq.s32.totalorder 0, 0
    // Predicated region
    $region18: #{tpu_custom_call.1} parent=1 // pred_check
      %p53 = pneg %p52
    $region19: #{tpu_custom_call.1} parent=1 // pred_check_branch
      %55 = sbr.rel (%p53) target = $region21
    $region20: #{tpu_custom_call.1} parent=1 // pred_region
      %56 = vst [vmem:[#allocation7] sm:$0xff] 0.0
      %57 = vst [vmem:[#allocation7 + $0x8] sm:$0xff] 0.0
      %58 = vst [vmem:[#allocation7 + $0x10] sm:$0xff] 0.0
      %59 = vst [vmem:[#allocation7 + $0x18] sm:$0xff] 0.0
    $region21: #{tpu_custom_call.1} parent=1 // pred_fallthru
      _
    %v60 = vld [vmem:[#allocation2] sm:$0xff]
    %v61 = vld [vmem:[#allocation2 + $0x8] sm:$0xff]
    %v62 = vld [vmem:[#allocation2 + $0x10] sm:$0xff]
    %v63 = vld [vmem:[#allocation2 + $0x18] sm:$0xff]
    %v64 = vld [vmem:[#allocation5] sm:$0xff]
    %v65 = vld [vmem:[#allocation5 + $0x8] sm:$0xff]
    %v66 = vld [vmem:[#allocation5 + $0x10] sm:$0xff]
    %v67 = vld [vmem:[#allocation5 + $0x18] sm:$0xff]
    %v68 = vsub.f32 %v60, %v64
    %v69 = vsub.f32 %v61, %v65
    %v70 = vsub.f32 %v62, %v66
    %v71 = vsub.f32 %v63, %v67
    %v72 = vmul.f32 %v68, %v68
    %v73 = vmul.f32 %v69, %v69
    %v74 = vmul.f32 %v70, %v70
    %v75 = vmul.f32 %v71, %v71
    %v76 = vld [vmem:[#allocation7] sm:$0xff]
    %v77 = vld [vmem:[#allocation7 + $0x8] sm:$0xff]
    %v78 = vld [vmem:[#allocation7 + $0x10] sm:$0xff]
    %v79 = vld [vmem:[#allocation7 + $0x18] sm:$0xff]
    %v80 = vadd.f32 %v72, 0.0
    %v81 = vadd.f32 %v73, 0.0
    %v82 = vadd.f32 %v74, 0.0
    %v83 = vadd.f32 %v75, 0.0
    %v84 = vadd.f32 %v76, %v80
    %v85 = vadd.f32 %v77, %v81
    %v86 = vadd.f32 %v78, %v82
    %v87 = vadd.f32 %v79, %v83
    %88 = vst [vmem:[#allocation7] sm:$0xff] %v84
    %89 = vst [vmem:[#allocation7 + $0x8] sm:$0xff] %v85
    %90 = vst [vmem:[#allocation7 + $0x10] sm:$0xff] %v86
    %91 = vst [vmem:[#allocation7 + $0x18] sm:$0xff] %v87
    // Predicated region
    $region22: #{tpu_custom_call.1} parent=1 // pred_check
      _
    $region23: #{tpu_custom_call.1} parent=1 // pred_check_branch
      %93 = sbr.rel (0) target = $region25
    $region24: #{tpu_custom_call.1} parent=1 // pred_region
      %s95 = ssub.s32 512, 512
      %96 = vsyncadd [#allocation4], %s95
      %s97 = sshll.u32 [#allocation7], 4
      %s98 = int_to_ptr.vmem [resolvable:$true] %s97
      %103 = dma.vmem_to_hbm [thread:$0]  %s98, 512, %s2, [#allocation4], 128, 128, 8
    $region25: #{tpu_custom_call.1} parent=1 // pred_fallthru
      _
    // Predicated region
    $region26: #{tpu_custom_call.1} parent=1 // pred_check
      _
    $region27: #{tpu_custom_call.1} parent=1 // pred_check_branch
      %105 = sbr.rel (0) target = $region29
    $region28: #{tpu_custom_call.1} parent=1 // pred_region
      %106 = dma.done [#allocation4], 512
    $region29: #{tpu_custom_call.1} parent=1 // pred_fallthru
      _
    %107 = vsyncpa [#allocation3], 1
    %108 = vsyncpa [#allocation6], 1
    %109 = vsyncpa [#allocation4], 1

</llo_original>
